<compile_context>
chip_gen: v5e
topology: v5e:2x2
jax: 0.10.0
libtpu: 0.0.40
codegen_flags: <defaults>
</compile_context>

<pallas_src>
import math
import functools

import jax
import jax.numpy as jnp
from jax.experimental import pallas as pl
from jax.experimental.pallas import tpu as pltpu


def _rel_mha_kernel(x_ref, wqkv_ref, w_ref, out_ref, *, num_heads, att_dim):
    x = x_ref[0]                      # (N, E)
    wqkv = wqkv_ref[...]              # (E, 3*H*A)  -- VMEM-resident weights
    w_out = w_ref[...]                # (H*A, E)

    ha = num_heads * att_dim
    inv_sqrt_a = 1.0 / math.sqrt(att_dim)

    # One wide, lane-dense projection for Q, K, V of every head (single MXU op).
    proj = jnp.dot(x, wqkv, preferred_element_type=jnp.float32)   # (N, 3*H*A)

    # Scale q (N*A elems) rather than the (N,N) score matrix.
    q_all = proj[:, :ha] * inv_sqrt_a
    k_all = proj[:, ha:2 * ha]
    v_all = proj[:, 2 * ha:3 * ha]

    head_outs = []
    for h in range(num_heads):        # static, fully unrolled (H is small)
        sl = slice(h * att_dim, (h + 1) * att_dim)
        q = q_all[:, sl]              # (N, A)
        k = k_all[:, sl]              # (N, A)
        v = v_all[:, sl]              # (N, A)

        # q @ k^T without materializing a transpose: contract the last axes.
        s = jax.lax.dot_general(
            q, k, (((1,), (1,)), ((), ())),
            preferred_element_type=jnp.float32)                   # (N, N)
        s = s - jnp.max(s, axis=-1, keepdims=True)
        e = jnp.exp(s)
        # TODO(synk): pl.reciprocal(approx=True) would co-issue on the EUP but
        # needs a looser numerical tolerance; kept exact here.
        p = e * pl.reciprocal(jnp.sum(e, axis=-1, keepdims=True), approx=False)

        head_outs.append(jnp.dot(p, v, preferred_element_type=jnp.float32))

    att = jnp.concatenate(head_outs, axis=-1)                     # (N, H*A)
    out = jnp.dot(att, w_out, preferred_element_type=jnp.float32)  # (N, E)
    out_ref[0] = out.astype(out_ref.dtype)


@jax.jit
def relational_multihead_atten(embs, q_w, k_w, v_w, w):
    """embs: (B, N, E); q_w/k_w/v_w: (H, E, A); w: (H*A, E) -> (B, N, E)."""
    B, N, E = embs.shape
    H, _, A = q_w.shape
    HA = H * A

    # (H, E, A) -> (E, H*A) so x @ W yields head-concatenated projections,
    # then fuse Q/K/V into a single (E, 3*H*A) weight slab.
    def head_concat(p):
        return jnp.transpose(p, (1, 0, 2)).reshape(E, HA)

    wqkv = jnp.concatenate(
        [head_concat(q_w), head_concat(k_w), head_concat(v_w)], axis=-1)

    kernel = functools.partial(_rel_mha_kernel, num_heads=H, att_dim=A)

    out = pl.pallas_call(
        kernel,
        out_shape=jax.ShapeDtypeStruct((B, N, E), embs.dtype),
        grid_spec=pltpu.PrefetchScalarGridSpec(
            num_scalar_prefetch=0,
            grid=(B,),
            in_specs=[
                pl.BlockSpec((1, N, E), lambda b: (b, 0, 0)),      # embs tile
                pl.BlockSpec((E, 3 * HA), lambda b: (0, 0)),       # fused QKV weights (resident)
                pl.BlockSpec((HA, E), lambda b: (0, 0)),           # output proj (resident)
            ],
            out_specs=pl.BlockSpec((1, N, E), lambda b: (b, 0, 0)),
        ),
        compiler_params=pltpu.CompilerParams(
            dimension_semantics=("parallel",),
        ),
    )(embs, wqkv, w)
    return out


def _xavier_uniform(key, shape, gain):
    # Matches torch.nn.init.xavier_uniform_ fan computation for >=2-D tensors.
    receptive = 1
    for d in shape[2:]:
        receptive *= d
    fan_in = shape[1] * receptive
    fan_out = shape[0] * receptive
    bound = gain * math.sqrt(6.0 / (fan_in + fan_out))
    return jax.random.uniform(key, shape, jnp.float32, -bound, bound)


def _reference(embs, q_w, k_w, v_w, w):
    # Pure-JAX reference mirroring the PyTorch forward (high-precision matmuls).
    hp = jax.lax.Precision.HIGHEST
    A = q_w.shape[-1]
    x = embs[:, None]                                              # (B, 1, N, E)
    q = jnp.matmul(x, q_w[None], precision=hp)                     # (B, H, N, A)
    k = jnp.matmul(x, k_w[None], precision=hp)
    v = jnp.matmul(x, v_w[None], precision=hp)
    s = jnp.matmul(q, jnp.swapaxes(k, -1, -2), precision=hp) / math.sqrt(A)
    p = jax.nn.softmax(s, axis=-1)
    att = jnp.matmul(p, v, precision=hp)                           # (B, H, N, A)
    att = jnp.transpose(att, (0, 2, 1, 3)).reshape(embs.shape[0], embs.shape[1], -1)
    return jnp.matmul(att, w, precision=hp)


if __name__ == "__main__":
    # Small shapes consistent with the module's forward.
    B, N, E, A, H = 2, 8, 32, 16, 4
    gain = math.sqrt(2.0)  # nn.init.calculate_gain('relu')

    key = jax.random.PRNGKey(0)
    key_x, key_q, key_k, key_v, key_o = jax.random.split(key, 5)

    embs = jax.random.normal(key_x, (B, N, E), jnp.float32)
    q_w = _xavier_uniform(key_q, (H, E, A), gain)
    k_w = _xavier_uniform(key_k, (H, E, A), gain)
    v_w = _xavier_uniform(key_v, (H, E, A), gain)
    w = _xavier_uniform(key_o, (H * A, E), gain)

    out = jax.block_until_ready(relational_multihead_atten(embs, q_w, k_w, v_w, w))

    ref = _reference(embs, q_w, k_w, v_w, w)
    assert out.shape == (B, N, E)
    # Tolerance accounts for matmul-precision/rounding-order differences
    # between the fused in-kernel MXU matmuls and the XLA reference.
    assert jnp.allclose(out, ref, rtol=1e-3, atol=1e-3), "mismatch vs reference"

    print("KERNEL_OK")
</pallas_src>

<mosaic_0001>
module attributes {stable_mosaic.version = 11 : i64} {
  func.func @_rel_mha_kernel(%arg0: i32, %arg1: memref<1x8x32xf32, #tpu.memory_space<vmem>>, %arg2: memref<32x192xf32, #tpu.memory_space<vmem>>, %arg3: memref<64x32xf32, #tpu.memory_space<vmem>>, %arg4: memref<1x8x32xf32, #tpu.memory_space<vmem>>) attributes {dimension_semantics = [#tpu.dimension_semantics<parallel>], iteration_bounds = array<i64: 2>, scalar_prefetch = 0 : i64, scratch_operands = 0 : i64, tpu.core_type = #tpu.core_type<tc>, window_params = [{transform_indices = @transform_0, window_bounds = array<i64: 1, 8, 32>}, {pipeline_mode = #tpu.pipeline_mode<synchronous>, transform_indices = @transform_1, window_bounds = array<i64: 32, 192>}, {pipeline_mode = #tpu.pipeline_mode<synchronous>, transform_indices = @transform_2, window_bounds = array<i64: 64, 32>}, {transform_indices = @transform_3, window_bounds = array<i64: 1, 8, 32>}]} {
    %c0 = arith.constant 0 : index
    %c0_0 = arith.constant 0 : index
    %c0_1 = arith.constant 0 : index
    %0 = vector.load %arg1[%c0, %c0_0, %c0_1] : memref<1x8x32xf32, #tpu.memory_space<vmem>>, vector<1x8x32xf32>
    %1 = vector.shape_cast %0 : vector<1x8x32xf32> to vector<8x32xf32>
    %c0_2 = arith.constant 0 : index
    %c0_3 = arith.constant 0 : index
    %2 = vector.load %arg2[%c0_2, %c0_3] : memref<32x192xf32, #tpu.memory_space<vmem>>, vector<32x192xf32>
    %c0_4 = arith.constant 0 : index
    %c0_5 = arith.constant 0 : index
    %3 = vector.load %arg3[%c0_4, %c0_5] : memref<64x32xf32, #tpu.memory_space<vmem>>, vector<64x32xf32>
    %cst = arith.constant dense<0.000000e+00> : vector<8x192xf32>
    %4 = tpu.matmul %1, %2, %cst {dimension_numbers = #tpu.dot_dimension_numbers<[1], [0], [0], [1], [0, 0, 1, 1], [], []>} : vector<8x32xf32>, vector<32x192xf32>, vector<8x192xf32> -> vector<8x192xf32>
    %5 = vector.extract_strided_slice %4 {offsets = [0, 0], sizes = [8, 64], strides = [1, 1]} : vector<8x192xf32> to vector<8x64xf32>
    %cst_6 = arith.constant 2.500000e-01 : f32
    %6 = vector.broadcast %cst_6 : f32 to vector<8x64xf32>
    %7 = arith.mulf %5, %6 : vector<8x64xf32>
    %8 = vector.extract_strided_slice %4 {offsets = [0, 64], sizes = [8, 64], strides = [1, 1]} : vector<8x192xf32> to vector<8x64xf32>
    %9 = vector.extract_strided_slice %4 {offsets = [0, 128], sizes = [8, 64], strides = [1, 1]} : vector<8x192xf32> to vector<8x64xf32>
    %10 = vector.extract_strided_slice %7 {offsets = [0, 0], sizes = [8, 16], strides = [1, 1]} : vector<8x64xf32> to vector<8x16xf32>
    %11 = vector.extract_strided_slice %8 {offsets = [0, 0], sizes = [8, 16], strides = [1, 1]} : vector<8x64xf32> to vector<8x16xf32>
    %12 = vector.extract_strided_slice %9 {offsets = [0, 0], sizes = [8, 16], strides = [1, 1]} : vector<8x64xf32> to vector<8x16xf32>
    %cst_7 = arith.constant dense<0.000000e+00> : vector<8x8xf32>
    %13 = tpu.matmul %10, %11, %cst_7 {dimension_numbers = #tpu.dot_dimension_numbers<[1], [1], [0], [0], [0, 0, 1, 0], [], []>} : vector<8x16xf32>, vector<8x16xf32>, vector<8x8xf32> -> vector<8x8xf32>
    %cst_8 = arith.constant dense<0xFF800000> : vector<8xf32>
    %14 = vector.multi_reduction <maximumf>, %13, %cst_8 [1] : vector<8x8xf32> to vector<8xf32>
    %15 = vector.shape_cast %14 : vector<8xf32> to vector<8x1xf32>
    %16 = vector.broadcast %15 : vector<8x1xf32> to vector<8x8xf32>
    %17 = arith.subf %13, %16 : vector<8x8xf32>
    %18 = math.exp %17 : vector<8x8xf32>
    %cst_9 = arith.constant dense<0.000000e+00> : vector<8xf32>
    %19 = vector.multi_reduction <add>, %18, %cst_9 [1] : vector<8x8xf32> to vector<8xf32>
    %20 = vector.shape_cast %19 : vector<8xf32> to vector<8x1xf32>
    %21 = tpu.reciprocal %20 : vector<8x1xf32> -> vector<8x1xf32>
    %22 = vector.broadcast %21 : vector<8x1xf32> to vector<8x8xf32>
    %23 = arith.mulf %18, %22 : vector<8x8xf32>
    %cst_10 = arith.constant dense<0.000000e+00> : vector<8x16xf32>
    %24 = tpu.matmul %23, %12, %cst_10 {dimension_numbers = #tpu.dot_dimension_numbers<[1], [0], [0], [1], [0, 0, 1, 1], [], []>} : vector<8x8xf32>, vector<8x16xf32>, vector<8x16xf32> -> vector<8x16xf32>
    %25 = vector.extract_strided_slice %7 {offsets = [0, 16], sizes = [8, 16], strides = [1, 1]} : vector<8x64xf32> to vector<8x16xf32>
    %26 = vector.extract_strided_slice %8 {offsets = [0, 16], sizes = [8, 16], strides = [1, 1]} : vector<8x64xf32> to vector<8x16xf32>
    %27 = vector.extract_strided_slice %9 {offsets = [0, 16], sizes = [8, 16], strides = [1, 1]} : vector<8x64xf32> to vector<8x16xf32>
    %cst_11 = arith.constant dense<0.000000e+00> : vector<8x8xf32>
    %28 = tpu.matmul %25, %26, %cst_11 {dimension_numbers = #tpu.dot_dimension_numbers<[1], [1], [0], [0], [0, 0, 1, 0], [], []>} : vector<8x16xf32>, vector<8x16xf32>, vector<8x8xf32> -> vector<8x8xf32>
    %cst_12 = arith.constant dense<0xFF800000> : vector<8xf32>
    %29 = vector.multi_reduction <maximumf>, %28, %cst_12 [1] : vector<8x8xf32> to vector<8xf32>
    %30 = vector.shape_cast %29 : vector<8xf32> to vector<8x1xf32>
    %31 = vector.broadcast %30 : vector<8x1xf32> to vector<8x8xf32>
    %32 = arith.subf %28, %31 : vector<8x8xf32>
    %33 = math.exp %32 : vector<8x8xf32>
    %cst_13 = arith.constant dense<0.000000e+00> : vector<8xf32>
    %34 = vector.multi_reduction <add>, %33, %cst_13 [1] : vector<8x8xf32> to vector<8xf32>
    %35 = vector.shape_cast %34 : vector<8xf32> to vector<8x1xf32>
    %36 = tpu.reciprocal %35 : vector<8x1xf32> -> vector<8x1xf32>
    %37 = vector.broadcast %36 : vector<8x1xf32> to vector<8x8xf32>
    %38 = arith.mulf %33, %37 : vector<8x8xf32>
    %cst_14 = arith.constant dense<0.000000e+00> : vector<8x16xf32>
    %39 = tpu.matmul %38, %27, %cst_14 {dimension_numbers = #tpu.dot_dimension_numbers<[1], [0], [0], [1], [0, 0, 1, 1], [], []>} : vector<8x8xf32>, vector<8x16xf32>, vector<8x16xf32> -> vector<8x16xf32>
    %40 = vector.extract_strided_slice %7 {offsets = [0, 32], sizes = [8, 16], strides = [1, 1]} : vector<8x64xf32> to vector<8x16xf32>
    %41 = vector.extract_strided_slice %8 {offsets = [0, 32], sizes = [8, 16], strides = [1, 1]} : vector<8x64xf32> to vector<8x16xf32>
    %42 = vector.extract_strided_slice %9 {offsets = [0, 32], sizes = [8, 16], strides = [1, 1]} : vector<8x64xf32> to vector<8x16xf32>
    %cst_15 = arith.constant dense<0.000000e+00> : vector<8x8xf32>
    %43 = tpu.matmul %40, %41, %cst_15 {dimension_numbers = #tpu.dot_dimension_numbers<[1], [1], [0], [0], [0, 0, 1, 0], [], []>} : vector<8x16xf32>, vector<8x16xf32>, vector<8x8xf32> -> vector<8x8xf32>
    %cst_16 = arith.constant dense<0xFF800000> : vector<8xf32>
    %44 = vector.multi_reduction <maximumf>, %43, %cst_16 [1] : vector<8x8xf32> to vector<8xf32>
    %45 = vector.shape_cast %44 : vector<8xf32> to vector<8x1xf32>
    %46 = vector.broadcast %45 : vector<8x1xf32> to vector<8x8xf32>
    %47 = arith.subf %43, %46 : vector<8x8xf32>
    %48 = math.exp %47 : vector<8x8xf32>
    %cst_17 = arith.constant dense<0.000000e+00> : vector<8xf32>
    %49 = vector.multi_reduction <add>, %48, %cst_17 [1] : vector<8x8xf32> to vector<8xf32>
    %50 = vector.shape_cast %49 : vector<8xf32> to vector<8x1xf32>
    %51 = tpu.reciprocal %50 : vector<8x1xf32> -> vector<8x1xf32>
    %52 = vector.broadcast %51 : vector<8x1xf32> to vector<8x8xf32>
    %53 = arith.mulf %48, %52 : vector<8x8xf32>
    %cst_18 = arith.constant dense<0.000000e+00> : vector<8x16xf32>
    %54 = tpu.matmul %53, %42, %cst_18 {dimension_numbers = #tpu.dot_dimension_numbers<[1], [0], [0], [1], [0, 0, 1, 1], [], []>} : vector<8x8xf32>, vector<8x16xf32>, vector<8x16xf32> -> vector<8x16xf32>
    %55 = vector.extract_strided_slice %7 {offsets = [0, 48], sizes = [8, 16], strides = [1, 1]} : vector<8x64xf32> to vector<8x16xf32>
    %56 = vector.extract_strided_slice %8 {offsets = [0, 48], sizes = [8, 16], strides = [1, 1]} : vector<8x64xf32> to vector<8x16xf32>
    %57 = vector.extract_strided_slice %9 {offsets = [0, 48], sizes = [8, 16], strides = [1, 1]} : vector<8x64xf32> to vector<8x16xf32>
    %cst_19 = arith.constant dense<0.000000e+00> : vector<8x8xf32>
    %58 = tpu.matmul %55, %56, %cst_19 {dimension_numbers = #tpu.dot_dimension_numbers<[1], [1], [0], [0], [0, 0, 1, 0], [], []>} : vector<8x16xf32>, vector<8x16xf32>, vector<8x8xf32> -> vector<8x8xf32>
    %cst_20 = arith.constant dense<0xFF800000> : vector<8xf32>
    %59 = vector.multi_reduction <maximumf>, %58, %cst_20 [1] : vector<8x8xf32> to vector<8xf32>
    %60 = vector.shape_cast %59 : vector<8xf32> to vector<8x1xf32>
    %61 = vector.broadcast %60 : vector<8x1xf32> to vector<8x8xf32>
    %62 = arith.subf %58, %61 : vector<8x8xf32>
    %63 = math.exp %62 : vector<8x8xf32>
    %cst_21 = arith.constant dense<0.000000e+00> : vector<8xf32>
    %64 = vector.multi_reduction <add>, %63, %cst_21 [1] : vector<8x8xf32> to vector<8xf32>
    %65 = vector.shape_cast %64 : vector<8xf32> to vector<8x1xf32>
    %66 = tpu.reciprocal %65 : vector<8x1xf32> -> vector<8x1xf32>
    %67 = vector.broadcast %66 : vector<8x1xf32> to vector<8x8xf32>
    %68 = arith.mulf %63, %67 : vector<8x8xf32>
    %cst_22 = arith.constant dense<0.000000e+00> : vector<8x16xf32>
    %69 = tpu.matmul %68, %57, %cst_22 {dimension_numbers = #tpu.dot_dimension_numbers<[1], [0], [0], [1], [0, 0, 1, 1], [], []>} : vector<8x8xf32>, vector<8x16xf32>, vector<8x16xf32> -> vector<8x16xf32>
    %70 = tpu.concatenate %24, %39, %54, %69 in 1 : vector<8x16xf32>, vector<8x16xf32>, vector<8x16xf32>, vector<8x16xf32> -> vector<8x64xf32>
    %cst_23 = arith.constant dense<0.000000e+00> : vector<8x32xf32>
    %71 = tpu.matmul %70, %3, %cst_23 {dimension_numbers = #tpu.dot_dimension_numbers<[1], [0], [0], [1], [0, 0, 1, 1], [], []>} : vector<8x64xf32>, vector<64x32xf32>, vector<8x32xf32> -> vector<8x32xf32>
    %c0_24 = arith.constant 0 : index
    %c0_25 = arith.constant 0 : index
    %c0_26 = arith.constant 0 : index
    %72 = vector.load %arg4[%c0_24, %c0_25, %c0_26] : memref<1x8x32xf32, #tpu.memory_space<vmem>>, vector<1x8x32xf32>
    %73 = vector.shape_cast %72 : vector<1x8x32xf32> to vector<8x32xf32>
    %74 = vector.shape_cast %71 : vector<8x32xf32> to vector<1x8x32xf32>
    tpu.vector_store %arg4[%c0_24, %c0_25, %c0_26], %74 {strides = array<i32>} : memref<1x8x32xf32, #tpu.memory_space<vmem>>, vector<1x8x32xf32>,
    return
  }
  func.func @transform_0(%arg0: i32) -> (i32, i32, i32) {
    %c0_i32 = arith.constant 0 : i32
    %c0_i32_0 = arith.constant 0 : i32
    %c0_i32_1 = arith.constant 0 : i32
    return %arg0, %c0_i32, %c0_i32_0 : i32, i32, i32
  }
  func.func @transform_1(%arg0: i32) -> (i32, i32) {
    %c0_i32 = arith.constant 0 : i32
    %c0_i32_0 = arith.constant 0 : i32
    %c0_i32_1 = arith.constant 0 : i32
    return %c0_i32, %c0_i32_0 : i32, i32
  }
  func.func @transform_2(%arg0: i32) -> (i32, i32) {
    %c0_i32 = arith.constant 0 : i32
    %c0_i32_0 = arith.constant 0 : i32
    %c0_i32_1 = arith.constant 0 : i32
    return %c0_i32, %c0_i32_0 : i32, i32
  }
  func.func @transform_3(%arg0: i32) -> (i32, i32, i32) {
    %c0_i32 = arith.constant 0 : i32
    %c0_i32_0 = arith.constant 0 : i32
    %c0_i32_1 = arith.constant 0 : i32
    return %arg0, %c0_i32, %c0_i32_0 : i32, i32, i32
  }
}

</mosaic_0001>

<llo_original>
// kernel: relational_multihead_atten.1
$region0: #{relational_multihead_atten.1}
  #allocation0 [shape = 'u32[]', space=smem, size = 0x4, offset = 0x4, fixed_abs, tag = 'smem constant byte address 0x4 - core index']
  #allocation1 [shape = 'u32[72,128]{1,0:T(1,128)}', space=vmem, size = 0x9000, scoped, tag = 'internal scratch']
  %s0 = inlined_call_operand.vmem [shape: f32[2,8,32], index: 0, kind: input, shape index: {}]
  %s1 = inlined_call_operand.vmem [shape: f32[32,192], index: 1, kind: input, shape index: {}]
  %s2 = inlined_call_operand.vmem [shape: f32[64,32], index: 2, kind: input, shape index: {}]
  %s3 = inlined_call_operand.hbm [shape: f32[2,8,32], index: 3, kind: output, shape index: {}]
  %s4 = sld [smem:[#allocation0]]
  $region45: #{relational_multihead_atten.1} parent=0
    _
  %s6 = ssub.s32 1, %s4
  %s7 = scalar_select 0, %s6, %s4
  $region1: #{relational_multihead_atten.1} parent=0
    #allocation2 [shape = 'u8[8192]{0}', space=vmem, size = 0x2000, scoped, tag = 'output window, operand 0']
    #allocation3 [shape = 's32[2]{0}', space=sflag, size = 0x8, scoped, tag = 'scoped memory for relational_multihead_atten.1']
    %8 = vsyncpa [#allocation3], 0
    %s9 = scalar_lea.sflag [#allocation3], 1
    %10 = vsyncpa %s9, 0
    loop: start=0, step=1, limit=4
    $region2: #{relational_multihead_atten.1} parent=1 // loop_pre_header
      _
    $region3: #{relational_multihead_atten.1} parent=1 // loop_header
      %s12 = sphi 0, %s16
      %p13 = scmp.ge.s32.totalorder %s12, 4
      %s22 = sphi 0, %s24
      %s25 = sphi 0, %s22
      %s26 = sphi 0, %s25
      %s42 = sphi 0, %s26
      %s46 = sphi 0, %s46
      %s48 = sphi 0, %s46
      %s49 = sphi 0, %s48
      %s63 = sphi 0, %s49
      %s67 = sphi 0, %s67
      %s69 = sphi 0, %s67
      %s70 = sphi 0, %s69
      %s84 = sphi 0, %s70
      %s90 = sphi 0, %s92
      %s93 = sphi 0, %s90
      %s94 = sphi 0, %s93
      %s110 = sphi 0, %s94
    $region4: #{relational_multihead_atten.1} parent=1 // loop_header_branch
      %15 = sbr.rel (%p13) target = $region8
    $region5: #{relational_multihead_atten.1} parent=1 // loop_body
      %s17 = ssub.s32 %s12, 1
      %s18 = ssub.s32 %s12, 2
      %s19 = sadd.s32 %s12, 1
      %s20 = ssub.s32 %s12, %s19
      %p21 = scmp.eq.s32.totalorder %s20, 0
      %s23 = sadd.s32 %s22, 1
      %s24 = scalar_select %p21, %s22, %s23
      %p27 = pneg %p21
      %p28 = scmp.eq.s32.totalorder %s12, 1
      %p29 = por %p27, %p28
      %p30 = scmp.ne.s32.totalorder %s22, %s25
      %p31 = scmp.eq.s32.totalorder %s12, 0
      %p32 = por %p30, %p31
      %p33 = scmp.ne.s32.totalorder %s22, %s25
      %p34 = scmp.eq.s32.totalorder %s17, 1
      %p35 = por %p33, %p34
      %p36 = scmp.ne.s32.totalorder %s25, %s26
      %p37 = scmp.eq.s32.totalorder %s17, 0
      %p38 = por %p36, %p37
      %p39 = scmp.ne.s32.totalorder %s25, %s26
      %p40 = scmp.eq.s32.totalorder %s18, 1
      %p41 = por %p39, %p40
      %p43 = scmp.ne.s32.totalorder %s26, %s42
      %p44 = scmp.eq.s32.totalorder %s18, 0
      %p45 = por %p43, %p44
      %s47 = sadd.s32 %s46, 1
      %p50 = scmp.eq.s32.totalorder %s12, 1
      %p51 = scmp.ne.s32.totalorder %s46, %s48
      %p52 = scmp.eq.s32.totalorder %s12, 0
      %p53 = por %p51, %p52
      %p54 = scmp.ne.s32.totalorder %s46, %s48
      %p55 = scmp.eq.s32.totalorder %s17, 1
      %p56 = por %p54, %p55
      %p57 = scmp.ne.s32.totalorder %s48, %s49
      %p58 = scmp.eq.s32.totalorder %s17, 0
      %p59 = por %p57, %p58
      %p60 = scmp.ne.s32.totalorder %s48, %s49
      %p61 = scmp.eq.s32.totalorder %s18, 1
      %p62 = por %p60, %p61
      %p64 = scmp.ne.s32.totalorder %s49, %s63
      %p65 = scmp.eq.s32.totalorder %s18, 0
      %p66 = por %p64, %p65
      %s68 = sadd.s32 %s67, 1
      %p71 = scmp.eq.s32.totalorder %s12, 1
      %p72 = scmp.ne.s32.totalorder %s67, %s69
      %p73 = scmp.eq.s32.totalorder %s12, 0
      %p74 = por %p72, %p73
      %p75 = scmp.ne.s32.totalorder %s67, %s69
      %p76 = scmp.eq.s32.totalorder %s17, 1
      %p77 = por %p75, %p76
      %p78 = scmp.ne.s32.totalorder %s69, %s70
      %p79 = scmp.eq.s32.totalorder %s17, 0
      %p80 = por %p78, %p79
      %p81 = scmp.ne.s32.totalorder %s69, %s70
      %p82 = scmp.eq.s32.totalorder %s18, 1
      %p83 = por %p81, %p82
      %p85 = scmp.ne.s32.totalorder %s70, %s84
      %p86 = scmp.eq.s32.totalorder %s18, 0
      %p87 = por %p85, %p86
      %s88 = ssub.s32 %s12, %s19
      %p89 = scmp.eq.s32.totalorder %s88, 0
      %s91 = sadd.s32 %s90, 1
      %s92 = scalar_select %p89, %s90, %s91
      %p95 = pneg %p89
      %p96 = scmp.eq.s32.totalorder %s12, 1
      %p97 = por %p95, %p96
      %p98 = scmp.ne.s32.totalorder %s90, %s93
      %p99 = scmp.eq.s32.totalorder %s12, 0
      %p100 = por %p98, %p99
      %p101 = scmp.ne.s32.totalorder %s90, %s93
      %p102 = scmp.eq.s32.totalorder %s17, 1
      %p103 = por %p101, %p102
      %p104 = scmp.ne.s32.totalorder %s93, %s94
      %p105 = scmp.eq.s32.totalorder %s17, 0
      %p106 = por %p104, %p105
      %p107 = scmp.ne.s32.totalorder %s93, %s94
      %p108 = scmp.eq.s32.totalorder %s18, 1
      %p109 = por %p107, %p108
      %p111 = scmp.ne.s32.totalorder %s94, %s110
      %p112 = scmp.eq.s32.totalorder %s18, 0
      %p113 = por %p111, %p112
      %p114 = scmp.le.s32.totalorder 1, %s12
      %p115 = scmp.lt.s32.totalorder %s12, 3
      %p116 = pnand %p114, %p115
      %p117 = pneg %p116
      // Predicated region
      $region9: #{relational_multihead_atten.1} parent=5 // pred_check
        _
      $region10: #{relational_multihead_atten.1} parent=5 // pred_check_branch
        %119 = sbr.rel (%p116) target = $region12
      $region11: #{relational_multihead_atten.1} parent=5 // pred_region
        %s120 = ssub.s32 %s12, 1
        // Predicated region
        $region13: #{relational_multihead_atten.1} parent=11 // pred_check
          %p121 = pneg %p59
        $region14: #{relational_multihead_atten.1} parent=11 // pred_check_branch
          %123 = sbr.rel (%p121) target = $region16
        $region15: #{relational_multihead_atten.1} parent=11 // pred_region
          _
        $region16: #{relational_multihead_atten.1} parent=11 // pred_fallthru
          _
        // Predicated region
        $region17: #{relational_multihead_atten.1} parent=11 // pred_check
          %p124 = pneg %p80
        $region18: #{relational_multihead_atten.1} parent=11 // pred_check_branch
          %126 = sbr.rel (%p124) target = $region20
        $region19: #{relational_multihead_atten.1} parent=11 // pred_region
          _
        $region20: #{relational_multihead_atten.1} parent=11 // pred_fallthru
          _
      $region12: #{relational_multihead_atten.1} parent=5 // pred_fallthru
        _
      %p127 = scmp.lt.s32.totalorder %s12, 2
      // Predicated region
      $region21: #{relational_multihead_atten.1} parent=5 // pred_check
        %p128 = pneg %p127
      $region22: #{relational_multihead_atten.1} parent=5 // pred_check_branch
        %130 = sbr.rel (%p128) target = $region24
      $region23: #{relational_multihead_atten.1} parent=5 // pred_region
        // Predicated region
        $region25: #{relational_multihead_atten.1} parent=23 // pred_check
          %p131 = pneg %p32
        $region26: #{relational_multihead_atten.1} parent=23 // pred_check_branch
          %133 = sbr.rel (%p131) target = $region28
        $region27: #{relational_multihead_atten.1} parent=23 // pred_region
          %p134 = scmp.lt.s32.totalorder %s12, 1
          %s135 = scalar_select %p134, %s12, 1
          %s136 = smul.addr %s135, 8
          %s137 = scalar_lea.vmem %s0, %s136
        $region28: #{relational_multihead_atten.1} parent=23 // pred_fallthru
          _
      $region24: #{relational_multihead_atten.1} parent=5 // pred_fallthru
        _
      %p138 = scmp.le.s32.totalorder 1, %s12
      %p139 = scmp.lt.s32.totalorder %s12, 3
      %p140 = pnand %p138, %p139
      %p141 = pneg %p140
      // Predicated region
      $region29: #{relational_multihead_atten.1} parent=5 // pred_check
        _
      $region30: #{relational_multihead_atten.1} parent=5 // pred_check_branch
        %143 = sbr.rel (%p140) target = $region32
      $region31: #{relational_multihead_atten.1} parent=5 // pred_region
        %s144 = ssub.s32 %s12, 1
        %p145 = scmp.lt.s32.totalorder %s17, 1
        %s146 = scalar_select %p145, %s17, 1
        %s147 = smul.addr %s146, 8
        %s148 = scalar_lea.vmem %s0, %s147
        %p149 = pneg %p38
        %p150 = pneg %p35
        %p151 = pneg %p59
        %p152 = pneg %p56
        %p153 = pneg %p80
        %p154 = pneg %p77
        %p155 = pneg %p106
        %p156 = pneg %p103
        %s157 = sand.u32 %s93, 1
        %s158 = scalar_lea.sflag [#allocation3], %s157
        %s159 = sand.u32 %s93, 1
        %s160 = smul.addr %s159, 8
        %s161 = scalar_lea.vmem [#allocation2], %s160
        %p162 = scmp.lt.s32.totalorder %s17, 1
        %s163 = scalar_select %p162, %s17, 1
        %s164 = smul.addr %s163, 8
        %s165 = scalar_lea.vmem %s0, %s164
        %v166 = vld [vmem:[%s165] sm:$0xff]
        %v167 = vld [vmem:[%s1] sm:$0xff]
        %v168 = vld [vmem:[%s1 + $0x8] sm:$0xff]
        %v169 = vld [vmem:[%s1 + $0x10] sm:$0xff]
        %v170 = vld [vmem:[%s1 + $0x18] sm:$0xff]
        %v171 = vld [vmem:[%s1 + $0x20] sm:$0xff]
        %v172 = vld [vmem:[%s1 + $0x28] sm:$0xff]
        %v173 = vld [vmem:[%s1 + $0x30] sm:$0xff]
        %v174 = vld [vmem:[%s1 + $0x38] sm:$0xff]
        %v175 = vld [vmem:[%s2] sm:$0xff]
        %v176 = vld [vmem:[%s2 + $0x8] sm:$0xff]
        %v177 = vld [vmem:[%s2 + $0x10] sm:$0xff]
        %v178 = vld [vmem:[%s2 + $0x18] sm:$0xff]
        %v179 = vld [vmem:[%s2 + $0x20] sm:$0xff]
        %v180 = vld [vmem:[%s2 + $0x28] sm:$0xff]
        %v181 = vld [vmem:[%s2 + $0x30] sm:$0xff]
        %v182 = vld [vmem:[%s2 + $0x38] sm:$0xff]
        %vm183 = vcmask 261120
        %v185 = vsel %vm183, %v166, 0
        %187 = vmatpush.msra.mxu0 0.0
        %188 = vmatpush.msra.mxu0 0.0
        %189 = vmatpush.msra.mxu0 0.0
        %190 = vmatpush.msra.mxu0 0.0
        %191 = vmatpush.msra.mxu0 0.0
        %192 = vmatpush.msra.mxu0 0.0
        %193 = vmatpush.msra.mxu0 0.0
        %194 = vmatpush.msra.mxu0 0.0
        %195 = vmatpush.msra.mxu0 0.0
        %196 = vmatpush.msra.mxu0 0.0
        %197 = vmatpush.msra.mxu0 0.0
        %198 = vmatpush.msra.mxu0 0.0
        %199 = vmatpush.msra.mxu0 %v173
        %200 = vmatpush.msra.mxu0 %v171
        %201 = vmatpush.msra.mxu0 %v169
        %202 = vmatpush.msra.mxu0 %v167
        %203 = vmatmul.f32.gmra.mxu0 %v185
        %v204 = vpop.f32.mrf.mxu0
        %v205 = vadd.f32 0.0, %v204
        %206 = vdwg.mxu0
        %207 = vmatpush.msra.mxu0 0.0
        %208 = vmatpush.msra.mxu0 0.0
        %209 = vmatpush.msra.mxu0 0.0
        %210 = vmatpush.msra.mxu0 0.0
        %211 = vmatpush.msra.mxu0 0.0
        %212 = vmatpush.msra.mxu0 0.0
        %213 = vmatpush.msra.mxu0 0.0
        %214 = vmatpush.msra.mxu0 0.0
        %215 = vmatpush.msra.mxu0 0.0
        %216 = vmatpush.msra.mxu0 0.0
        %217 = vmatpush.msra.mxu0 0.0
        %218 = vmatpush.msra.mxu0 0.0
        %219 = vmatpush.msra.mxu0 %v174
        %220 = vmatpush.msra.mxu0 %v172
        %221 = vmatpush.msra.mxu0 %v170
        %222 = vmatpush.msra.mxu0 %v168
        %223 = vmatmul.f32.gmra.mxu0 %v185
        %v224 = vpop.f32.mrf.mxu0
        %v225 = vadd.f32 0.0, %v224
        %226 = vdwg.mxu0
        %v227 = vmul.f32 %v205, 0.25
        %229 = vrot.lane.b32.xlu0 %v205, 64
        %v230 = vpop.permute.xlu0 %229
        %vm231 = vcmask 130048
        %v233 = vsel %vm231, %v227, 0
        %v235 = vsel %vm231, %v230, 0
        %237 = vmatpush.xpose.msra.mxu0 0.0
        %238 = vmatpush.xpose.msra.mxu0 0.0
        %239 = vmatpush.xpose.msra.mxu0 0.0
        %240 = vmatpush.xpose.msra.mxu0 0.0
        %241 = vmatpush.xpose.msra.mxu0 0.0
        %242 = vmatpush.xpose.msra.mxu0 0.0
        %243 = vmatpush.xpose.msra.mxu0 0.0
        %244 = vmatpush.xpose.msra.mxu0 0.0
        %245 = vmatpush.xpose.msra.mxu0 0.0
        %246 = vmatpush.xpose.msra.mxu0 0.0
        %247 = vmatpush.xpose.msra.mxu0 0.0
        %248 = vmatpush.xpose.msra.mxu0 0.0
        %249 = vmatpush.xpose.msra.mxu0 0.0
        %250 = vmatpush.xpose.msra.mxu0 0.0
        %251 = vmatpush.xpose.msra.mxu0 0.0
        %252 = vmatpush.xpose.msra.mxu0 %v235
        %253 = vmatmul.f32.gmra.mxu0 %v233
        %v254 = vpop.f32.mrf.mxu0
        %v255 = vadd.f32 0.0, %v254
        %256 = vdwg.mxu0
        %vm257 = vcmask 64512
        %v258 = vsel %vm257, %v255, -inf
        %259 = vmax.xlane.f32.xlu0 %v258
        %v260 = vpop.xlane.xlu0 %259
        %v261 = vsub.f32 %v255, %v260
        %v262 = vmul.f32 %v261, 1.442695
        %v263 = vpow.pop %v262
        %v264 = vsel %vm257, %v263, 0.0
        %265 = vadd.xlane.f32.xlu0 %v264
        %v266 = vpop.xlane.xlu0 %265
        %v267 = vrcp.pop %v266
        %v268 = vmul.f32 %v266, %v267
        %v269 = vsub.f32 1.0, %v268
        %v270 = vmul.f32 %v267, %v269
        %v271 = vadd.f32 %v267, %v270
        %vm272 = vweird.f32 %v266
        %vm273 = vweird.f32 %v267
        %vm274 = vmor %vm272, %vm273
        %v275 = vsel %vm274, %v267, %v271
        %v276 = vand.u32 2147483647, %v266
        %vm277 = vcmp.eq.f32.partialorder %v276, 8.507059e+37
        %v278 = vand.u32 %v266, 2147483648
        %v279 = vor.u32 1.1754944e-38, %v278
        %v280 = vsel %vm277, %v279, %v275
        %v281 = vmul.f32 %v263, %v280
        %v283 = vsel %vm257, %v281, 0
        %285 = vmatpush.msra.mxu0 0.0
        %286 = vmatpush.msra.mxu0 0.0
        %287 = vmatpush.msra.mxu0 0.0
        %288 = vmatpush.msra.mxu0 0.0
        %289 = vmatpush.msra.mxu0 0.0
        %290 = vmatpush.msra.mxu0 0.0
        %291 = vmatpush.msra.mxu0 0.0
        %292 = vmatpush.msra.mxu0 0.0
        %293 = vmatpush.msra.mxu0 0.0
        %294 = vmatpush.msra.mxu0 0.0
        %295 = vmatpush.msra.mxu0 0.0
        %296 = vmatpush.msra.mxu0 0.0
        %297 = vmatpush.msra.mxu0 0.0
        %298 = vmatpush.msra.mxu0 0.0
        %299 = vmatpush.msra.mxu0 0.0
        %300 = vmatpush.msra.mxu0 %v225
        %301 = vmatmul.f32.gmra.mxu0 %v283
        %v302 = vpop.f32.mrf.mxu0
        %v303 = vadd.f32 0.0, %v302
        %304 = vdwg.mxu0
        %305 = vrot.lane.b32.xlu0 %v227, 112
        %v306 = vpop.permute.xlu0 %305
        %307 = vrot.lane.b32.xlu0 %v205, 48
        %v308 = vpop.permute.xlu0 %307
        %v309 = vsel %vm231, %v306, 0
        %v311 = vsel %vm231, %v308, 0
        %313 = vmatpush.xpose.msra.mxu0 0.0
        %314 = vmatpush.xpose.msra.mxu0 0.0
        %315 = vmatpush.xpose.msra.mxu0 0.0
        %316 = vmatpush.xpose.msra.mxu0 0.0
        %317 = vmatpush.xpose.msra.mxu0 0.0
        %318 = vmatpush.xpose.msra.mxu0 0.0
        %319 = vmatpush.xpose.msra.mxu0 0.0
        %320 = vmatpush.xpose.msra.mxu0 0.0
        %321 = vmatpush.xpose.msra.mxu0 0.0
        %322 = vmatpush.xpose.msra.mxu0 0.0
        %323 = vmatpush.xpose.msra.mxu0 0.0
        %324 = vmatpush.xpose.msra.mxu0 0.0
        %325 = vmatpush.xpose.msra.mxu0 0.0
        %326 = vmatpush.xpose.msra.mxu0 0.0
        %327 = vmatpush.xpose.msra.mxu0 0.0
        %328 = vmatpush.xpose.msra.mxu0 %v311
        %329 = vmatmul.f32.gmra.mxu0 %v309
        %v330 = vpop.f32.mrf.mxu0
        %v331 = vadd.f32 0.0, %v330
        %332 = vdwg.mxu0
        %v333 = vsel %vm257, %v331, -inf
        %334 = vmax.xlane.f32.xlu0 %v333
        %v335 = vpop.xlane.xlu0 %334
        %v336 = vsub.f32 %v331, %v335
        %v337 = vmul.f32 %v336, 1.442695
        %v338 = vpow.pop %v337
        %v339 = vsel %vm257, %v338, 0.0
        %340 = vadd.xlane.f32.xlu0 %v339
        %v341 = vpop.xlane.xlu0 %340
        %v342 = vrcp.pop %v341
        %v343 = vmul.f32 %v341, %v342
        %v344 = vsub.f32 1.0, %v343
        %v345 = vmul.f32 %v342, %v344
        %v346 = vadd.f32 %v342, %v345
        %vm347 = vweird.f32 %v341
        %vm348 = vweird.f32 %v342
        %vm349 = vmor %vm347, %vm348
        %v350 = vsel %vm349, %v342, %v346
        %v351 = vand.u32 2147483647, %v341
        %vm352 = vcmp.eq.f32.partialorder %v351, 8.507059e+37
        %v353 = vand.u32 %v341, 2147483648
        %v354 = vor.u32 1.1754944e-38, %v353
        %v355 = vsel %vm352, %v354, %v350
        %v356 = vmul.f32 %v338, %v355
        %358 = vrot.lane.b32.xlu0 %v225, 112
        %v359 = vpop.permute.xlu0 %358
        %v362 = vsel %vm257, %v356, 0
        %364 = vmatpush.msra.mxu0 0.0
        %365 = vmatpush.msra.mxu0 0.0
        %366 = vmatpush.msra.mxu0 0.0
        %367 = vmatpush.msra.mxu0 0.0
        %368 = vmatpush.msra.mxu0 0.0
        %369 = vmatpush.msra.mxu0 0.0
        %370 = vmatpush.msra.mxu0 0.0
        %371 = vmatpush.msra.mxu0 0.0
        %372 = vmatpush.msra.mxu0 0.0
        %373 = vmatpush.msra.mxu0 0.0
        %374 = vmatpush.msra.mxu0 0.0
        %375 = vmatpush.msra.mxu0 0.0
        %376 = vmatpush.msra.mxu0 0.0
        %377 = vmatpush.msra.mxu0 0.0
        %378 = vmatpush.msra.mxu0 0.0
        %379 = vmatpush.msra.mxu0 %v359
        %380 = vmatmul.f32.gmra.mxu0 %v362
        %v381 = vpop.f32.mrf.mxu0
        %v382 = vadd.f32 0.0, %v381
        %383 = vdwg.mxu0
        %384 = vrot.lane.b32.xlu0 %v227, 96
        %v385 = vpop.permute.xlu0 %384
        %386 = vrot.lane.b32.xlu0 %v205, 32
        %v387 = vpop.permute.xlu0 %386
        %v388 = vsel %vm231, %v385, 0
        %v390 = vsel %vm231, %v387, 0
        %392 = vmatpush.xpose.msra.mxu0 0.0
        %393 = vmatpush.xpose.msra.mxu0 0.0
        %394 = vmatpush.xpose.msra.mxu0 0.0
        %395 = vmatpush.xpose.msra.mxu0 0.0
        %396 = vmatpush.xpose.msra.mxu0 0.0
        %397 = vmatpush.xpose.msra.mxu0 0.0
        %398 = vmatpush.xpose.msra.mxu0 0.0
        %399 = vmatpush.xpose.msra.mxu0 0.0
        %400 = vmatpush.xpose.msra.mxu0 0.0
        %401 = vmatpush.xpose.msra.mxu0 0.0
        %402 = vmatpush.xpose.msra.mxu0 0.0
        %403 = vmatpush.xpose.msra.mxu0 0.0
        %404 = vmatpush.xpose.msra.mxu0 0.0
        %405 = vmatpush.xpose.msra.mxu0 0.0
        %406 = vmatpush.xpose.msra.mxu0 0.0
        %407 = vmatpush.xpose.msra.mxu0 %v390
        %408 = vmatmul.f32.gmra.mxu0 %v388
        %v409 = vpop.f32.mrf.mxu0
        %v410 = vadd.f32 0.0, %v409
        %411 = vdwg.mxu0
        %v412 = vsel %vm257, %v410, -inf
        %413 = vmax.xlane.f32.xlu0 %v412
        %v414 = vpop.xlane.xlu0 %413
        %v415 = vsub.f32 %v410, %v414
        %v416 = vmul.f32 %v415, 1.442695
        %v417 = vpow.pop %v416
        %v418 = vsel %vm257, %v417, 0.0
        %419 = vadd.xlane.f32.xlu0 %v418
        %v420 = vpop.xlane.xlu0 %419
        %v421 = vrcp.pop %v420
        %v422 = vmul.f32 %v420, %v421
        %v423 = vsub.f32 1.0, %v422
        %v424 = vmul.f32 %v421, %v423
        %v425 = vadd.f32 %v421, %v424
        %vm426 = vweird.f32 %v420
        %vm427 = vweird.f32 %v421
        %vm428 = vmor %vm426, %vm427
        %v429 = vsel %vm428, %v421, %v425
        %v430 = vand.u32 2147483647, %v420
        %vm431 = vcmp.eq.f32.partialorder %v430, 8.507059e+37
        %v432 = vand.u32 %v420, 2147483648
        %v433 = vor.u32 1.1754944e-38, %v432
        %v434 = vsel %vm431, %v433, %v429
        %v435 = vmul.f32 %v417, %v434
        %436 = vrot.lane.b32.xlu0 %v225, 96
        %v437 = vpop.permute.xlu0 %436
        %v440 = vsel %vm257, %v435, 0
        %442 = vmatpush.msra.mxu0 0.0
        %443 = vmatpush.msra.mxu0 0.0
        %444 = vmatpush.msra.mxu0 0.0
        %445 = vmatpush.msra.mxu0 0.0
        %446 = vmatpush.msra.mxu0 0.0
        %447 = vmatpush.msra.mxu0 0.0
        %448 = vmatpush.msra.mxu0 0.0
        %449 = vmatpush.msra.mxu0 0.0
        %450 = vmatpush.msra.mxu0 0.0
        %451 = vmatpush.msra.mxu0 0.0
        %452 = vmatpush.msra.mxu0 0.0
        %453 = vmatpush.msra.mxu0 0.0
        %454 = vmatpush.msra.mxu0 0.0
        %455 = vmatpush.msra.mxu0 0.0
        %456 = vmatpush.msra.mxu0 0.0
        %457 = vmatpush.msra.mxu0 %v437
        %458 = vmatmul.f32.gmra.mxu0 %v440
        %v459 = vpop.f32.mrf.mxu0
        %v460 = vadd.f32 0.0, %v459
        %461 = vdwg.mxu0
        %462 = vrot.lane.b32.xlu0 %v227, 80
        %v463 = vpop.permute.xlu0 %462
        %464 = vrot.lane.b32.xlu0 %v205, 16
        %v465 = vpop.permute.xlu0 %464
        %v466 = vsel %vm231, %v463, 0
        %v468 = vsel %vm231, %v465, 0
        %470 = vmatpush.xpose.msra.mxu0 0.0
        %471 = vmatpush.xpose.msra.mxu0 0.0
        %472 = vmatpush.xpose.msra.mxu0 0.0
        %473 = vmatpush.xpose.msra.mxu0 0.0
        %474 = vmatpush.xpose.msra.mxu0 0.0
        %475 = vmatpush.xpose.msra.mxu0 0.0
        %476 = vmatpush.xpose.msra.mxu0 0.0
        %477 = vmatpush.xpose.msra.mxu0 0.0
        %478 = vmatpush.xpose.msra.mxu0 0.0
        %479 = vmatpush.xpose.msra.mxu0 0.0
        %480 = vmatpush.xpose.msra.mxu0 0.0
        %481 = vmatpush.xpose.msra.mxu0 0.0
        %482 = vmatpush.xpose.msra.mxu0 0.0
        %483 = vmatpush.xpose.msra.mxu0 0.0
        %484 = vmatpush.xpose.msra.mxu0 0.0
        %485 = vmatpush.xpose.msra.mxu0 %v468
        %486 = vmatmul.f32.gmra.mxu0 %v466
        %v487 = vpop.f32.mrf.mxu0
        %v488 = vadd.f32 0.0, %v487
        %489 = vdwg.mxu0
        %v490 = vsel %vm257, %v488, -inf
        %491 = vmax.xlane.f32.xlu0 %v490
        %v492 = vpop.xlane.xlu0 %491
        %v493 = vsub.f32 %v488, %v492
        %v494 = vmul.f32 %v493, 1.442695
        %v495 = vpow.pop %v494
        %v496 = vsel %vm257, %v495, 0.0
        %497 = vadd.xlane.f32.xlu0 %v496
        %v498 = vpop.xlane.xlu0 %497
        %v499 = vrcp.pop %v498
        %v500 = vmul.f32 %v498, %v499
        %v501 = vsub.f32 1.0, %v500
        %v502 = vmul.f32 %v499, %v501
        %v503 = vadd.f32 %v499, %v502
        %vm504 = vweird.f32 %v498
        %vm505 = vweird.f32 %v499
        %vm506 = vmor %vm504, %vm505
        %v507 = vsel %vm506, %v499, %v503
        %v508 = vand.u32 2147483647, %v498
        %vm509 = vcmp.eq.f32.partialorder %v508, 8.507059e+37
        %v510 = vand.u32 %v498, 2147483648
        %v511 = vor.u32 1.1754944e-38, %v510
        %v512 = vsel %vm509, %v511, %v507
        %v513 = vmul.f32 %v495, %v512
        %514 = vrot.lane.b32.xlu0 %v225, 80
        %v515 = vpop.permute.xlu0 %514
        %v518 = vsel %vm257, %v513, 0
        %520 = vmatpush.msra.mxu0 0.0
        %521 = vmatpush.msra.mxu0 0.0
        %522 = vmatpush.msra.mxu0 0.0
        %523 = vmatpush.msra.mxu0 0.0
        %524 = vmatpush.msra.mxu0 0.0
        %525 = vmatpush.msra.mxu0 0.0
        %526 = vmatpush.msra.mxu0 0.0
        %527 = vmatpush.msra.mxu0 0.0
        %528 = vmatpush.msra.mxu0 0.0
        %529 = vmatpush.msra.mxu0 0.0
        %530 = vmatpush.msra.mxu0 0.0
        %531 = vmatpush.msra.mxu0 0.0
        %532 = vmatpush.msra.mxu0 0.0
        %533 = vmatpush.msra.mxu0 0.0
        %534 = vmatpush.msra.mxu0 0.0
        %535 = vmatpush.msra.mxu0 %v515
        %536 = vmatmul.f32.gmra.mxu0 %v518
        %v537 = vpop.f32.mrf.mxu0
        %v538 = vadd.f32 0.0, %v537
        %539 = vdwg.mxu0
        %541 = vrot.lane.b32.xlu0 %v382, 16
        %v542 = vpop.permute.xlu0 %541
        %545 = vrot.lane.b32.xlu0 %v460, 32
        %v546 = vpop.permute.xlu0 %545
        %549 = vrot.lane.b32.xlu0 %v538, 48
        %v550 = vpop.permute.xlu0 %549
        %v552 = vsel %vm231, %v303, %v542
        %v553 = vsel %vm183, %v552, %v546
        %vm554 = vcmask 392192
        %v555 = vsel %vm554, %v553, %v550
        %vm556 = vcmask 523264
        %v558 = vsel %vm556, %v555, 0
        %560 = vmatpush.msra.mxu0 0.0
        %561 = vmatpush.msra.mxu0 0.0
        %562 = vmatpush.msra.mxu0 0.0
        %563 = vmatpush.msra.mxu0 0.0
        %564 = vmatpush.msra.mxu0 0.0
        %565 = vmatpush.msra.mxu0 0.0
        %566 = vmatpush.msra.mxu0 0.0
        %567 = vmatpush.msra.mxu0 0.0
        %568 = vmatpush.msra.mxu0 %v182
        %569 = vmatpush.msra.mxu0 %v181
        %570 = vmatpush.msra.mxu0 %v180
        %571 = vmatpush.msra.mxu0 %v179
        %572 = vmatpush.msra.mxu0 %v178
        %573 = vmatpush.msra.mxu0 %v177
        %574 = vmatpush.msra.mxu0 %v176
        %575 = vmatpush.msra.mxu0 %v175
        %576 = vmatmul.f32.gmra.mxu0 %v558
        %v577 = vpop.f32.mrf.mxu0
        %v578 = vadd.f32 0.0, %v577
        %579 = vdwg.mxu0
        %580 = vst.msk [vmem:[%s161] sm:$0xff] %vm183, %v578
        %s581 = sand.u32 %s93, 1
        %s582 = scalar_lea.sflag [#allocation3], %s581
        %s583 = sand.u32 %s93, 1
        %s584 = smul.addr %s583, 8
        %s585 = scalar_lea.vmem [#allocation2], %s584
        // Predicated region
        $region33: #{relational_multihead_atten.1} parent=31 // pred_check
          %p586 = pneg %p103
        $region34: #{relational_multihead_atten.1} parent=31 // pred_check_branch
          %588 = sbr.rel (%p586) target = $region36
        $region35: #{relational_multihead_atten.1} parent=31 // pred_region
          %590 = vsyncadd %s582, 0
          %s591 = smul.addr %s17, 8
          %s592 = scalar_lea.hbm %s3, %s591
          %s594 = sshll.u32 %s585, 4
          %s595 = int_to_ptr.vmem [resolvable:$true] %s594
          %s596 = sshll.u32 %s592, 4
          %s597 = int_to_ptr.hbm [resolvable:$true] %s596
          %599 = dma.vmem_to_hbm [thread:$0]  %s595, 128, %s597, %s582
        $region36: #{relational_multihead_atten.1} parent=31 // pred_fallthru
          _
      $region32: #{relational_multihead_atten.1} parent=5 // pred_fallthru
        _
      %p600 = scmp.le.s32.totalorder 2, %s12
      // Predicated region
      $region37: #{relational_multihead_atten.1} parent=5 // pred_check
        %p601 = pneg %p600
      $region38: #{relational_multihead_atten.1} parent=5 // pred_check_branch
        %603 = sbr.rel (%p601) target = $region40
      $region39: #{relational_multihead_atten.1} parent=5 // pred_region
        %s604 = ssub.s32 %s12, 2
        // Predicated region
        $region41: #{relational_multihead_atten.1} parent=39 // pred_check
          %p605 = pneg %p109
        $region42: #{relational_multihead_atten.1} parent=39 // pred_check_branch
          %607 = sbr.rel (%p605) target = $region44
        $region43: #{relational_multihead_atten.1} parent=39 // pred_region
          %s608 = sand.u32 %s94, 1
          %s609 = scalar_lea.sflag [#allocation3], %s608
          %s610 = sand.u32 %s94, 1
          %s611 = smul.addr %s610, 8
          %s612 = scalar_lea.vmem [#allocation2], %s611
          %614 = dma.done %s609, 128
        $region44: #{relational_multihead_atten.1} parent=39 // pred_fallthru
          _
      $region40: #{relational_multihead_atten.1} parent=5 // pred_fallthru
        _
    $region6: #{relational_multihead_atten.1} parent=1 // loop_footer
      %s16 = sadd.s32 1, %s12
    $region7: #{relational_multihead_atten.1} parent=1 // loop_footer_branch
      %11 = sbr.rel target = $region3
    $region8: #{relational_multihead_atten.1} parent=1 // loop_exit
      _
    %615 = vsyncpa [#allocation3], 1
    %s616 = scalar_lea.sflag [#allocation3], 1
    %617 = vsyncpa %s616, 1

</llo_original>
